<compile_context>
chip_gen: v7x
topology: tpu7x:2x2x1
jax: 0.10.0
libtpu: 0.0.40
codegen_flags: <defaults>
</compile_context>

<pallas_src>
import jax
import jax.numpy as jnp
from jax.experimental import pallas as pl
from jax.experimental.pallas import tpu as pltpu


def _round_up(n, m):
    return ((n + m - 1) // m) * m


def _pick_row_block(n_rows, cap=512):
    # Big row blocks amortize per-grid-step overhead (v5e/v6e: 128 MiB VMEM), but
    # keep >= 2 grid steps when the row count allows so v7x's 2 TensorCores both
    # get a share of the "parallel" axis.
    rb = min(cap, _round_up(n_rows, 8))
    while rb > 8 and _round_up(n_rows, rb) // rb < 2:
        rb = _round_up(rb // 2, 8)
    return rb


# ---------------------------------------------------------------------------
# Fused kernel: per-segment LayerNorm + SegMerging linear + prediction head.
# All operands are 2-D; per-segment structure lives in the (host-folded) weights.
# ---------------------------------------------------------------------------
def _merge_pred_kernel(xc_ref, pm_ref, pool_avg_ref, pool_t_ref,
                       wbig_ref, mbias_ref, wcomb_ref, bcomb_ref,
                       xo_ref, po_ref):
    # xc_ref       : (RB, S*WD)   one (b, ts) row per sublane row, segments concat
    # pm_ref       : (S*WD, S*WD) block-diag averaging matrix  -> per-segment mean
    # pool_avg_ref : (S*WD, S)    block-diag 1/WD columns      -> per-segment var
    # pool_t_ref   : (S, S*WD)    block-diag ones rows         -> rstd broadcast
    # wbig_ref     : (S*WD, SD_pad) kron(I_S, diag(gamma) @ W_merge^T), zero-padded
    # wcomb_ref    : (SD_pad, OL_pad) kron(W_hid^T, W_pred^T), zero-padded lanes
    xc = xc_ref[...]

    # Per-segment LayerNorm mean in ONE matmul (Pm is pre-averaged, block-diag).
    mean = jnp.dot(xc, pm_ref[...], preferred_element_type=jnp.float32)
    d = xc - mean

    # Per-segment variance reduced to the SMALL (RB, S) stats tile; rsqrt (EUP)
    # runs on (RB, S) only, then is broadcast back to (RB, S*WD) via the MXU.
    var_s = jnp.dot(d * d, pool_avg_ref[...], preferred_element_type=jnp.float32)
    rstd = jnp.dot(jax.lax.rsqrt(var_s + 1e-5), pool_t_ref[...],
                   preferred_element_type=jnp.float32)

    # LN gamma/beta are folded into wbig/mbias on the host -> no extra VPU passes.
    # (bf16 casts of the MXU operands here are a further v6e/v7x option; keep the
    #  mean/var/rsqrt statistics path in f32 if adopted.)
    xm = (jnp.dot(d * rstd, wbig_ref[...], preferred_element_type=jnp.float32)
          + mbias_ref[...])
    xo_ref[...] = xm                                          # (RB, SD_pad), lane-dense

    # Collapsed prediction head: linear_pred -> transpose -> linear_hid -> transpose.
    po_ref[...] = (jnp.dot(xm, wcomb_ref[...], preferred_element_type=jnp.float32)
                   + bcomb_ref[...])                          # (RB, OL_pad), lane-dense


# Prediction head only (used when win_size == 1, i.e. no SegMerging).
def _pred_only_kernel(x_ref, wcomb_ref, bcomb_ref, po_ref):
    po_ref[...] = (jnp.dot(x_ref[...], wcomb_ref[...],
                           preferred_element_type=jnp.float32) + bcomb_ref[...])


# ---------------------------------------------------------------------------
# Host-side weight folding — run ONCE per model (not per forward call).
# NOTE: the kron-folded operands grow ~S / S^2; fine for the paper's win_size=2 /
# small seg_num regime.  For large seg_num, split S back out as an 'arbitrary'
# reduction grid axis (this limit is hit first on v7x's 64 MiB VMEM).
# ---------------------------------------------------------------------------
def fold_scale_block_params(params, in_seg_num):
    hp = jax.lax.Precision.HIGHEST
    win = params["win_size"]
    D = params["pred_w_t"].shape[0]
    L = params["pred_w_t"].shape[1]
    O, S_hid = params["hid_w"].shape
    OL = O * L
    OL_pad = _round_up(OL, 128)      # lane-dense pred output (avoid vst.msk stores)

    # Collapsed prediction head: out[o,l] = sum_s hid_w[o,s]*(x_s @ pred_w_t)[l]
    #                                      + hid_b[o] + pred_b[l]*sum_s hid_w[o,s]
    w_comb = jnp.kron(params["hid_w"].T, params["pred_w_t"])                   # (S*D, O*L)
    b_comb = (params["hid_b"][:, None]
              + params["hid_w"].sum(axis=1)[:, None] * params["pred_b"][None, :]
              ).reshape(1, OL)

    folded = dict(win=win, D=D, L=L, O=O, OL=OL, OL_pad=OL_pad)

    if win > 1:
        seg = in_seg_num + ((-in_seg_num) % win)
        S = seg // win
        assert S == S_hid, "seg_num mismatch between hid_w and merged input"
        WD = win * D
        SWD = S * WD
        SD = S * D
        SD_pad = _round_up(SD, 128)

        eye_s = jnp.eye(S, dtype=jnp.float32)
        # Per-segment mean in ONE matmul:  mean_full = xc @ Pm.
        pm = jnp.kron(eye_s, jnp.full((WD, WD), 1.0 / WD, jnp.float32))        # (SWD, SWD)
        # Per-segment variance reduction (small stats) + rstd broadcast.
        pool_avg = jnp.kron(eye_s, jnp.full((WD, 1), 1.0 / WD, jnp.float32))   # (SWD, S)
        pool_t = jnp.kron(eye_s, jnp.ones((1, WD), jnp.float32))               # (S, SWD)
        # LN gamma folded into the merge weight, beta folded into the merge bias.
        wbig_g = jnp.kron(eye_s,
                          params["ln_gamma"][:, None] * params["merge_w_t"])   # (SWD, SD)
        mbias = jnp.tile(jnp.dot(params["ln_beta"], params["merge_w_t"],
                                 precision=hp) + params["merge_b"], S
                         ).reshape(1, SD)
        # Lane-dense zero-padding of the x_out slab (no-op when SD % 128 == 0).
        wbig_g = jnp.pad(wbig_g, ((0, 0), (0, SD_pad - SD)))
        mbias = jnp.pad(mbias, ((0, 0), (0, SD_pad - SD)))
        # Pred head consumes the (zero-padded) merged activation.
        w_comb = jnp.pad(w_comb, ((0, SD_pad - SD), (0, OL_pad - OL)))
        b_comb = jnp.pad(b_comb, ((0, 0), (0, OL_pad - OL)))
        folded.update(S=S, WD=WD, SWD=SWD, SD=SD, SD_pad=SD_pad,
                      Pm=pm, pool_avg=pool_avg, pool_t=pool_t,
                      wbig_g=wbig_g, mbias=mbias, w_comb=w_comb, b_comb=b_comb)
    else:
        S = S_hid
        SD = S * D
        w_comb = jnp.pad(w_comb, ((0, 0), (0, OL_pad - OL)))
        b_comb = jnp.pad(b_comb, ((0, 0), (0, OL_pad - OL)))
        folded.update(S=S, SD=SD, w_comb=w_comb, b_comb=b_comb)
    return folded


# ---------------------------------------------------------------------------
# scale_block forward
# ---------------------------------------------------------------------------
def scale_block_forward(x, b_rep_node, folded):
    del b_rep_node  # TODO(synk): only consumed by DGCRM (definition not provided)
    B, T, seg, D = x.shape
    R = B * T
    win = folded["win"]
    O, L, OL, OL_pad = folded["O"], folded["L"], folded["OL"], folded["OL_pad"]
    vmem_limit = 32 * 1024 * 1024   # explicit; <= default on v6e, safe on v7x (64 MiB phys)

    if win > 1:
        pad = (-seg) % win
        if pad:
            x = jnp.concatenate([x, x[:, :, -pad:, :]], axis=2)
        S, SWD = folded["S"], folded["SWD"]
        SD, SD_pad = folded["SD"], folded["SD_pad"]
        # Row-major flatten == torch.cat([x[:, :, i::win, :] for i in range(win)], -1)
        xc = x.reshape(R, SWD)

        RB = _pick_row_block(R)
        R_pad = _round_up(R, RB)
        if R_pad != R:
            xc = jnp.pad(xc, ((0, R_pad - R), (0, 0)))     # zero pad rows (harmless)

        x_flat, pred_flat = pl.pallas_call(
            _merge_pred_kernel,
            out_shape=(jax.ShapeDtypeStruct((R_pad, SD_pad), jnp.float32),
                       jax.ShapeDtypeStruct((R_pad, OL_pad), jnp.float32)),
            grid_spec=pltpu.PrefetchScalarGridSpec(
                num_scalar_prefetch=0,
                grid=(R_pad // RB,),
                in_specs=[
                    pl.BlockSpec((RB, SWD), lambda r: (r, 0)),
                    # Constant-index weight blocks (tiny at paper scales; switch to
                    # pipeline_mode=pl.Buffered(1) on v7x once seg_num grows).
                    pl.BlockSpec((SWD, SWD), lambda r: (0, 0)),
                    pl.BlockSpec((SWD, S), lambda r: (0, 0)),
                    pl.BlockSpec((S, SWD), lambda r: (0, 0)),
                    pl.BlockSpec((SWD, SD_pad), lambda r: (0, 0)),
                    pl.BlockSpec((1, SD_pad), lambda r: (0, 0)),
                    pl.BlockSpec((SD_pad, OL_pad), lambda r: (0, 0)),
                    pl.BlockSpec((1, OL_pad), lambda r: (0, 0)),
                ],
                out_specs=(pl.BlockSpec((RB, SD_pad), lambda r: (r, 0)),
                           pl.BlockSpec((RB, OL_pad), lambda r: (r, 0))),
            ),
            compiler_params=pltpu.CompilerParams(
                dimension_semantics=("parallel",),
                vmem_limit_bytes=vmem_limit),
        )(xc, folded["Pm"], folded["pool_avg"], folded["pool_t"],
          folded["wbig_g"], folded["mbias"], folded["w_comb"], folded["b_comb"])

        x_out = x_flat[:R, :SD].reshape(B, T, S, D)
        layer_predict = pred_flat[:R, :OL].reshape(B, T, O, L)
    else:
        # No SegMerging: x passes through unchanged; only the prediction head runs.
        S, SD = folded["S"], folded["SD"]
        xm = x.reshape(R, SD)
        RB = _pick_row_block(R)
        R_pad = _round_up(R, RB)
        if R_pad != R:
            xm = jnp.pad(xm, ((0, R_pad - R), (0, 0)))
        pred_flat = pl.pallas_call(
            _pred_only_kernel,
            out_shape=jax.ShapeDtypeStruct((R_pad, OL_pad), jnp.float32),
            grid_spec=pltpu.PrefetchScalarGridSpec(
                num_scalar_prefetch=0,
                grid=(R_pad // RB,),
                in_specs=[pl.BlockSpec((RB, SD), lambda r: (r, 0)),
                          pl.BlockSpec((SD, OL_pad), lambda r: (0, 0)),
                          pl.BlockSpec((1, OL_pad), lambda r: (0, 0))],
                out_specs=pl.BlockSpec((RB, OL_pad), lambda r: (r, 0)),
            ),
            compiler_params=pltpu.CompilerParams(
                dimension_semantics=("parallel",),
                vmem_limit_bytes=vmem_limit),
        )(xm, folded["w_comb"], folded["b_comb"])
        x_out = x
        layer_predict = pred_flat[:R, :OL].reshape(B, T, O, L)

    # TODO(synk): encode_layers (TwoStageAttentionLayer, DGCRM) omitted (identity).
    return x_out, layer_predict


# ---------------------------------------------------------------------------
# Pure-JAX reference of the PyTorch forward (numerical self-check, HIGHEST precision).
# ---------------------------------------------------------------------------
def _reference_forward(x, params):
    hp = jax.lax.Precision.HIGHEST
    win = params["win_size"]
    if win > 1:
        seg = x.shape[2]
        pad = (-seg) % win
        if pad:
            x = jnp.concatenate([x, x[:, :, -pad:, :]], axis=2)
        xc = jnp.concatenate([x[:, :, i::win, :] for i in range(win)], axis=-1)
        mean = jnp.mean(xc, axis=-1, keepdims=True)
        var = jnp.mean((xc - mean) ** 2, axis=-1, keepdims=True)
        xn = (xc - mean) / jnp.sqrt(var + 1e-5) * params["ln_gamma"] + params["ln_beta"]
        x = jnp.einsum("btsw,wd->btsd", xn, params["merge_w_t"],
                       precision=hp) + params["merge_b"]
    p = jnp.einsum("btsd,dl->btsl", x, params["pred_w_t"],
                   precision=hp) + params["pred_b"]            # (B,T,S,L)
    p = jnp.swapaxes(p, -1, -2)                                # (B,T,L,S)
    q = jnp.einsum("btls,os->btlo", p, params["hid_w"],
                   precision=hp) + params["hid_b"]             # (B,T,L,O)
    return x, jnp.swapaxes(q, -1, -2)                          # (B,T,O,L)


# ---------------------------------------------------------------------------
# Deterministic parameter init + driver
# ---------------------------------------------------------------------------
def init_params(key, d_model, win_size, seg_num, out_seg_num, seg_len):
    ks = jax.random.split(key, 6)
    wd = win_size * d_model
    return {
        "win_size": win_size,
        # SegMerging: LayerNorm(wd) + Linear(wd -> d_model)
        "ln_gamma": jnp.ones((wd,), jnp.float32),
        "ln_beta": jnp.zeros((wd,), jnp.float32),
        "merge_w_t": (jax.random.normal(ks[0], (wd, d_model)) * 0.05).astype(jnp.float32),
        "merge_b": (jax.random.normal(ks[1], (d_model,)) * 0.05).astype(jnp.float32),
        # linear_pred: Linear(d_model -> seg_len), stored transposed (D, L)
        "pred_w_t": (jax.random.normal(ks[2], (d_model, seg_len)) * 0.05).astype(jnp.float32),
        "pred_b": (jax.random.normal(ks[3], (seg_len,)) * 0.05).astype(jnp.float32),
        # linear_hid: Linear(seg_num -> out_seg_num), stored as (O, S)
        "hid_w": (jax.random.normal(ks[4], (out_seg_num, seg_num)) * 0.05).astype(jnp.float32),
        "hid_b": (jax.random.normal(ks[5], (out_seg_num,)) * 0.05).astype(jnp.float32),
    }


if __name__ == "__main__":
    key = jax.random.PRNGKey(0)
    k_x, k_g, k_p = jax.random.split(key, 3)

    B, ts_dim, d_model = 2, 4, 32
    win_size = 2
    in_seg = 8                       # seg_num of the incoming x
    seg_num = in_seg // win_size     # seg_num after merging (constructor arg)
    out_seg_num = 4
    seg_len = 8
    gcn_dim = 16

    x = jax.random.normal(k_x, (B, ts_dim, in_seg, d_model), dtype=jnp.float32)
    b_rep_node = jax.random.normal(k_g, (B, ts_dim, gcn_dim), dtype=jnp.float32)

    params = init_params(k_p, d_model, win_size, seg_num, out_seg_num, seg_len)
    # Weight folding is hoisted out of the forward: done ONCE here and reused.
    folded = fold_scale_block_params(params, in_seg)
    jax.block_until_ready(jax.tree_util.tree_leaves(folded))

    x_out, layer_predict = scale_block_forward(x, b_rep_node, folded)
    jax.block_until_ready((x_out, layer_predict))

    assert x_out.shape == (B, ts_dim, seg_num, d_model)
    assert layer_predict.shape == (B, ts_dim, out_seg_num, seg_len)

    # Tolerance tightened 20x vs previous (2e-2 -> 1e-3).  Kept above 1e-4 because
    # the kernel's f32 MXU matmuls may be decomposed into bf16 passes by Mosaic.
    x_ref, pred_ref = _reference_forward(x, params)
    assert bool(jnp.allclose(x_out, x_ref, atol=1e-3, rtol=1e-3)), "x_out mismatch"
    assert bool(jnp.allclose(layer_predict, pred_ref, atol=1e-3, rtol=1e-3)), "pred mismatch"

    print("KERNEL_OK")
</pallas_src>

<mosaic_0001>
module attributes {stable_mosaic.version = 11 : i64} {
  func.func @_merge_pred_kernel(%arg0: i32, %arg1: memref<8x256xf32, #tpu.memory_space<vmem>>, %arg2: memref<256x256xf32, #tpu.memory_space<vmem>>, %arg3: memref<256x4xf32, #tpu.memory_space<vmem>>, %arg4: memref<4x256xf32, #tpu.memory_space<vmem>>, %arg5: memref<256x128xf32, #tpu.memory_space<vmem>>, %arg6: memref<1x128xf32, #tpu.memory_space<vmem>>, %arg7: memref<128x128xf32, #tpu.memory_space<vmem>>, %arg8: memref<1x128xf32, #tpu.memory_space<vmem>>, %arg9: memref<8x128xf32, #tpu.memory_space<vmem>>, %arg10: memref<8x128xf32, #tpu.memory_space<vmem>>) attributes {dimension_semantics = [#tpu.dimension_semantics<parallel>], iteration_bounds = array<i64: 1>, scalar_prefetch = 0 : i64, scratch_operands = 0 : i64, tpu.core_type = #tpu.core_type<tc>, window_params = [{transform_indices = @transform_0, window_bounds = array<i64: 8, 256>}, {pipeline_mode = #tpu.pipeline_mode<synchronous>, transform_indices = @transform_1, window_bounds = array<i64: 256, 256>}, {pipeline_mode = #tpu.pipeline_mode<synchronous>, transform_indices = @transform_2, window_bounds = array<i64: 256, 4>}, {pipeline_mode = #tpu.pipeline_mode<synchronous>, transform_indices = @transform_3, window_bounds = array<i64: 4, 256>}, {pipeline_mode = #tpu.pipeline_mode<synchronous>, transform_indices = @transform_4, window_bounds = array<i64: 256, 128>}, {pipeline_mode = #tpu.pipeline_mode<synchronous>, transform_indices = @transform_5, window_bounds = array<i64: 1, 128>}, {pipeline_mode = #tpu.pipeline_mode<synchronous>, transform_indices = @transform_6, window_bounds = array<i64: 128, 128>}, {pipeline_mode = #tpu.pipeline_mode<synchronous>, transform_indices = @transform_7, window_bounds = array<i64: 1, 128>}, {transform_indices = @transform_8, window_bounds = array<i64: 8, 128>}, {transform_indices = @transform_9, window_bounds = array<i64: 8, 128>}]} {
    %c0 = arith.constant 0 : index
    %c0_0 = arith.constant 0 : index
    %0 = vector.load %arg1[%c0, %c0_0] : memref<8x256xf32, #tpu.memory_space<vmem>>, vector<8x256xf32>
    %c0_1 = arith.constant 0 : index
    %c0_2 = arith.constant 0 : index
    %1 = vector.load %arg2[%c0_1, %c0_2] : memref<256x256xf32, #tpu.memory_space<vmem>>, vector<256x256xf32>
    %cst = arith.constant dense<0.000000e+00> : vector<8x256xf32>
    %2 = tpu.matmul %0, %1, %cst {dimension_numbers = #tpu.dot_dimension_numbers<[1], [0], [0], [1], [0, 0, 1, 1], [], []>} : vector<8x256xf32>, vector<256x256xf32>, vector<8x256xf32> -> vector<8x256xf32>
    %3 = arith.subf %0, %2 : vector<8x256xf32>
    %4 = arith.mulf %3, %3 : vector<8x256xf32>
    %c0_3 = arith.constant 0 : index
    %c0_4 = arith.constant 0 : index
    %5 = vector.load %arg3[%c0_3, %c0_4] : memref<256x4xf32, #tpu.memory_space<vmem>>, vector<256x4xf32>
    %cst_5 = arith.constant dense<0.000000e+00> : vector<8x4xf32>
    %6 = tpu.matmul %4, %5, %cst_5 {dimension_numbers = #tpu.dot_dimension_numbers<[1], [0], [0], [1], [0, 0, 1, 1], [], []>} : vector<8x256xf32>, vector<256x4xf32>, vector<8x4xf32> -> vector<8x4xf32>
    %cst_6 = arith.constant 9.99999974E-6 : f32
    %7 = vector.broadcast %cst_6 : f32 to vector<8x4xf32>
    %8 = arith.addf %6, %7 : vector<8x4xf32>
    %9 = math.rsqrt %8 : vector<8x4xf32>
    %c0_7 = arith.constant 0 : index
    %c0_8 = arith.constant 0 : index
    %10 = vector.load %arg4[%c0_7, %c0_8] : memref<4x256xf32, #tpu.memory_space<vmem>>, vector<4x256xf32>
    %cst_9 = arith.constant dense<0.000000e+00> : vector<8x256xf32>
    %11 = tpu.matmul %9, %10, %cst_9 {dimension_numbers = #tpu.dot_dimension_numbers<[1], [0], [0], [1], [0, 0, 1, 1], [], []>} : vector<8x4xf32>, vector<4x256xf32>, vector<8x256xf32> -> vector<8x256xf32>
    %12 = arith.mulf %3, %11 : vector<8x256xf32>
    %c0_10 = arith.constant 0 : index
    %c0_11 = arith.constant 0 : index
    %13 = vector.load %arg5[%c0_10, %c0_11] : memref<256x128xf32, #tpu.memory_space<vmem>>, vector<256x128xf32>
    %cst_12 = arith.constant dense<0.000000e+00> : vector<8x128xf32>
    %14 = tpu.matmul %12, %13, %cst_12 {dimension_numbers = #tpu.dot_dimension_numbers<[1], [0], [0], [1], [0, 0, 1, 1], [], []>} : vector<8x256xf32>, vector<256x128xf32>, vector<8x128xf32> -> vector<8x128xf32>
    %c0_13 = arith.constant 0 : index
    %c0_14 = arith.constant 0 : index
    %15 = vector.load %arg6[%c0_13, %c0_14] : memref<1x128xf32, #tpu.memory_space<vmem>>, vector<1x128xf32>
    %16 = vector.broadcast %15 : vector<1x128xf32> to vector<8x128xf32>
    %17 = arith.addf %14, %16 : vector<8x128xf32>
    %c0_15 = arith.constant 0 : index
    %c0_16 = arith.constant 0 : index
    %18 = vector.load %arg9[%c0_15, %c0_16] : memref<8x128xf32, #tpu.memory_space<vmem>>, vector<8x128xf32>
    tpu.vector_store %arg9[%c0_15, %c0_16], %17 {strides = array<i32>} : memref<8x128xf32, #tpu.memory_space<vmem>>, vector<8x128xf32>,
    %c0_17 = arith.constant 0 : index
    %c0_18 = arith.constant 0 : index
    %19 = vector.load %arg7[%c0_17, %c0_18] : memref<128x128xf32, #tpu.memory_space<vmem>>, vector<128x128xf32>
    %cst_19 = arith.constant dense<0.000000e+00> : vector<8x128xf32>
    %20 = tpu.matmul %17, %19, %cst_19 {dimension_numbers = #tpu.dot_dimension_numbers<[1], [0], [0], [1], [0, 0, 1, 1], [], []>} : vector<8x128xf32>, vector<128x128xf32>, vector<8x128xf32> -> vector<8x128xf32>
    %c0_20 = arith.constant 0 : index
    %c0_21 = arith.constant 0 : index
    %21 = vector.load %arg8[%c0_20, %c0_21] : memref<1x128xf32, #tpu.memory_space<vmem>>, vector<1x128xf32>
    %22 = vector.broadcast %21 : vector<1x128xf32> to vector<8x128xf32>
    %23 = arith.addf %20, %22 : vector<8x128xf32>
    %c0_22 = arith.constant 0 : index
    %c0_23 = arith.constant 0 : index
    %24 = vector.load %arg10[%c0_22, %c0_23] : memref<8x128xf32, #tpu.memory_space<vmem>>, vector<8x128xf32>
    tpu.vector_store %arg10[%c0_22, %c0_23], %23 {strides = array<i32>} : memref<8x128xf32, #tpu.memory_space<vmem>>, vector<8x128xf32>,
    return
  }
  func.func @transform_0(%arg0: i32) -> (i32, i32) {
    %c0_i32 = arith.constant 0 : i32
    %c0_i32_0 = arith.constant 0 : i32
    return %arg0, %c0_i32 : i32, i32
  }
  func.func @transform_1(%arg0: i32) -> (i32, i32) {
    %c0_i32 = arith.constant 0 : i32
    %c0_i32_0 = arith.constant 0 : i32
    %c0_i32_1 = arith.constant 0 : i32
    return %c0_i32, %c0_i32_0 : i32, i32
  }
  func.func @transform_2(%arg0: i32) -> (i32, i32) {
    %c0_i32 = arith.constant 0 : i32
    %c0_i32_0 = arith.constant 0 : i32
    %c0_i32_1 = arith.constant 0 : i32
    return %c0_i32, %c0_i32_0 : i32, i32
  }
  func.func @transform_3(%arg0: i32) -> (i32, i32) {
    %c0_i32 = arith.constant 0 : i32
    %c0_i32_0 = arith.constant 0 : i32
    %c0_i32_1 = arith.constant 0 : i32
    return %c0_i32, %c0_i32_0 : i32, i32
  }
  func.func @transform_4(%arg0: i32) -> (i32, i32) {
    %c0_i32 = arith.constant 0 : i32
    %c0_i32_0 = arith.constant 0 : i32
    %c0_i32_1 = arith.constant 0 : i32
    return %c0_i32, %c0_i32_0 : i32, i32
  }
  func.func @transform_5(%arg0: i32) -> (i32, i32) {
    %c0_i32 = arith.constant 0 : i32
    %c0_i32_0 = arith.constant 0 : i32
    %c0_i32_1 = arith.constant 0 : i32
    return %c0_i32, %c0_i32_0 : i32, i32
  }
  func.func @transform_6(%arg0: i32) -> (i32, i32) {
    %c0_i32 = arith.constant 0 : i32
    %c0_i32_0 = arith.constant 0 : i32
    %c0_i32_1 = arith.constant 0 : i32
    return %c0_i32, %c0_i32_0 : i32, i32
  }
  func.func @transform_7(%arg0: i32) -> (i32, i32) {
    %c0_i32 = arith.constant 0 : i32
    %c0_i32_0 = arith.constant 0 : i32
    %c0_i32_1 = arith.constant 0 : i32
    return %c0_i32, %c0_i32_0 : i32, i32
  }
  func.func @transform_8(%arg0: i32) -> (i32, i32) {
    %c0_i32 = arith.constant 0 : i32
    %c0_i32_0 = arith.constant 0 : i32
    return %arg0, %c0_i32 : i32, i32
  }
  func.func @transform_9(%arg0: i32) -> (i32, i32) {
    %c0_i32 = arith.constant 0 : i32
    %c0_i32_0 = arith.constant 0 : i32
    return %arg0, %c0_i32 : i32, i32
  }
}

</mosaic_0001>

<llo_original>
// kernel: tpu_custom_call.1
$region0: #{tpu_custom_call.1}
  #allocation0 [shape = 'u32[]', space=smem, size = 0x4, offset = 0x4, fixed_abs, tag = 'smem constant byte address 0x4 - core index']
  #allocation1 [shape = 'u32[144,128]{1,0:T(1,128)}', space=vmem, size = 0x12000, scoped, tag = 'internal scratch']
  %s0 = inlined_call_operand.vmem [shape: f32[8,256], index: 0, kind: input, shape index: {}]
  %s1 = inlined_call_operand.hbm [shape: f32[256,256], index: 1, kind: input, shape index: {}]
  %s2 = inlined_call_operand.vmem [shape: f32[256,4], index: 2, kind: input, shape index: {}]
  %s3 = inlined_call_operand.hbm [shape: f32[4,256], index: 3, kind: input, shape index: {}]
  %s4 = inlined_call_operand.vmem [shape: f32[256,128], index: 4, kind: input, shape index: {}]
  %s5 = inlined_call_operand.vmem [shape: f32[1,128], index: 5, kind: input, shape index: {}]
  %s6 = inlined_call_operand.hbm [shape: f32[128,128], index: 6, kind: input, shape index: {}]
  %s7 = inlined_call_operand.vmem [shape: f32[1,128], index: 7, kind: input, shape index: {}]
  %s8 = inlined_call_operand.hbm [shape: f32[8,128], index: 8, kind: output, shape index: {0}]
  %s9 = inlined_call_operand.hbm [shape: f32[8,128], index: 9, kind: output, shape index: {1}]
  %10 = xla_tuple %s8, %s9
  %s11 = sld [smem:[#allocation0]]
  $region62: #{tpu_custom_call.1} parent=0
    _
  %s13 = ssub.s32 1, %s11
  %s14 = scalar_select 0, %s13, %s11
  $region1: #{tpu_custom_call.1} parent=0
    #allocation2 [shape = 'u8[262144]{0}', space=vmem, size = 0x40000, scoped, tag = 'input window, operand 1, single buffered']
    #allocation3 [shape = 's32[1]{0}', space=sflag, size = 0x4, scoped, tag = 'scoped memory for tpu_custom_call.1']
    #allocation4 [shape = 's32[1]{0}', space=sflag, size = 0x4, scoped, tag = 'scoped memory for tpu_custom_call.1']
    #allocation5 [shape = 'u8[4096]{0}', space=vmem, size = 0x1000, scoped, tag = 'input window, operand 3, single buffered']
    #allocation6 [shape = 's32[1]{0}', space=sflag, size = 0x4, scoped, tag = 'scoped memory for tpu_custom_call.1']
    #allocation7 [shape = 'u8[65536]{0}', space=vmem, size = 0x10000, scoped, tag = 'input window, operand 6, single buffered']
    #allocation8 [shape = 'u8[4096]{0}', space=vmem, size = 0x1000, scoped, tag = 'output window, operand 0, single buffered']
    #allocation9 [shape = 'u8[4096]{0}', space=vmem, size = 0x1000, scoped, tag = 'output window, operand 1, single buffered']
    #allocation10 [shape = 's32[1]{0}', space=sflag, size = 0x4, scoped, tag = 'scoped memory for tpu_custom_call.1']
    %15 = vsyncpa [#allocation3], 0
    %16 = vsyncpa [#allocation6], 0
    %17 = vsyncpa [#allocation4], 0
    %18 = vsyncpa [#allocation10], 0
    // Predicated region
    $region2: #{tpu_custom_call.1} parent=1 // pred_check
      _
    $region3: #{tpu_custom_call.1} parent=1 // pred_check_branch
      %20 = sbr.rel (0) target = $region5
    $region4: #{tpu_custom_call.1} parent=1 // pred_region
      _
    $region5: #{tpu_custom_call.1} parent=1 // pred_fallthru
      _
    // Predicated region
    $region6: #{tpu_custom_call.1} parent=1 // pred_check
      _
    $region7: #{tpu_custom_call.1} parent=1 // pred_check_branch
      %22 = sbr.rel (0) target = $region9
    $region8: #{tpu_custom_call.1} parent=1 // pred_region
      %s24 = ssub.s32 8192, 8192
      %25 = vsyncadd [#allocation3], %s24
      %s26 = sshll.u32 [#allocation2], 4
      %s27 = int_to_ptr.vmem [resolvable:$true] %s26
      %32 = dma.hbm_to_vmem [thread:$0]  %s1, 8192, %s27, [#allocation3], 256, 256, 16
    $region9: #{tpu_custom_call.1} parent=1 // pred_fallthru
      _
    // Predicated region
    $region10: #{tpu_custom_call.1} parent=1 // pred_check
      _
    $region11: #{tpu_custom_call.1} parent=1 // pred_check_branch
      %34 = sbr.rel (0) target = $region13
    $region12: #{tpu_custom_call.1} parent=1 // pred_region
      _
    $region13: #{tpu_custom_call.1} parent=1 // pred_fallthru
      _
    // Predicated region
    $region14: #{tpu_custom_call.1} parent=1 // pred_check
      _
    $region15: #{tpu_custom_call.1} parent=1 // pred_check_branch
      %36 = sbr.rel (0) target = $region17
    $region16: #{tpu_custom_call.1} parent=1 // pred_region
      %s38 = ssub.s32 128, 128
      %39 = vsyncadd [#allocation6], %s38
      %s41 = sshll.u32 [#allocation5], 4
      %s42 = int_to_ptr.vmem [resolvable:$true] %s41
      %44 = dma.hbm_to_vmem [thread:$0]  %s3, 128, %s42, [#allocation6]
    $region17: #{tpu_custom_call.1} parent=1 // pred_fallthru
      _
    // Predicated region
    $region18: #{tpu_custom_call.1} parent=1 // pred_check
      _
    $region19: #{tpu_custom_call.1} parent=1 // pred_check_branch
      %46 = sbr.rel (0) target = $region21
    $region20: #{tpu_custom_call.1} parent=1 // pred_region
      _
    $region21: #{tpu_custom_call.1} parent=1 // pred_fallthru
      _
    // Predicated region
    $region22: #{tpu_custom_call.1} parent=1 // pred_check
      _
    $region23: #{tpu_custom_call.1} parent=1 // pred_check_branch
      %48 = sbr.rel (0) target = $region25
    $region24: #{tpu_custom_call.1} parent=1 // pred_region
      _
    $region25: #{tpu_custom_call.1} parent=1 // pred_fallthru
      _
    // Predicated region
    $region26: #{tpu_custom_call.1} parent=1 // pred_check
      _
    $region27: #{tpu_custom_call.1} parent=1 // pred_check_branch
      %50 = sbr.rel (0) target = $region29
    $region28: #{tpu_custom_call.1} parent=1 // pred_region
      %s52 = ssub.s32 2048, 2048
      %53 = vsyncadd [#allocation6], %s52
      %s54 = sshll.u32 [#allocation7], 4
      %s55 = int_to_ptr.vmem [resolvable:$true] %s54
      %60 = dma.hbm_to_vmem [thread:$0]  %s6, 2048, %s55, [#allocation6], 128, 128, 8
    $region29: #{tpu_custom_call.1} parent=1 // pred_fallthru
      _
    // Predicated region
    $region30: #{tpu_custom_call.1} parent=1 // pred_check
      _
    $region31: #{tpu_custom_call.1} parent=1 // pred_check_branch
      %62 = sbr.rel (0) target = $region33
    $region32: #{tpu_custom_call.1} parent=1 // pred_region
      _
    $region33: #{tpu_custom_call.1} parent=1 // pred_fallthru
      _
    // Predicated region
    $region34: #{tpu_custom_call.1} parent=1 // pred_check
      _
    $region35: #{tpu_custom_call.1} parent=1 // pred_check_branch
      %64 = sbr.rel (0) target = $region37
    $region36: #{tpu_custom_call.1} parent=1 // pred_region
      %65 = dma.done [#allocation3], 8192
    $region37: #{tpu_custom_call.1} parent=1 // pred_fallthru
      _
    // Predicated region
    $region38: #{tpu_custom_call.1} parent=1 // pred_check
      _
    $region39: #{tpu_custom_call.1} parent=1 // pred_check_branch
      %67 = sbr.rel (0) target = $region41
    $region40: #{tpu_custom_call.1} parent=1 // pred_region
      %68 = dma.done [#allocation6], 128
    $region41: #{tpu_custom_call.1} parent=1 // pred_fallthru
      _
    // Predicated region
    $region42: #{tpu_custom_call.1} parent=1 // pred_check
      _
    $region43: #{tpu_custom_call.1} parent=1 // pred_check_branch
      %70 = sbr.rel (0) target = $region45
    $region44: #{tpu_custom_call.1} parent=1 // pred_region
      %71 = dma.done [#allocation6], 2048
    $region45: #{tpu_custom_call.1} parent=1 // pred_fallthru
      _
    %v72 = vld [vmem:[%s0] sm:$0xff]
    %v73 = vld [vmem:[%s0 + $0x8] sm:$0xff]
    %v74 = vld [vmem:[#allocation2] sm:$0xff]
    %v75 = vld [vmem:[#allocation2 + $0x8] sm:$0xff]
    %v76 = vld [vmem:[#allocation2 + $0x10] sm:$0xff]
    %v77 = vld [vmem:[#allocation2 + $0x18] sm:$0xff]
    %v78 = vld [vmem:[#allocation2 + $0x20] sm:$0xff]
    %v79 = vld [vmem:[#allocation2 + $0x28] sm:$0xff]
    %v80 = vld [vmem:[#allocation2 + $0x30] sm:$0xff]
    %v81 = vld [vmem:[#allocation2 + $0x38] sm:$0xff]
    %v82 = vld [vmem:[#allocation2 + $0x40] sm:$0xff]
    %v83 = vld [vmem:[#allocation2 + $0x48] sm:$0xff]
    %v84 = vld [vmem:[#allocation2 + $0x50] sm:$0xff]
    %v85 = vld [vmem:[#allocation2 + $0x58] sm:$0xff]
    %v86 = vld [vmem:[#allocation2 + $0x60] sm:$0xff]
    %v87 = vld [vmem:[#allocation2 + $0x68] sm:$0xff]
    %v88 = vld [vmem:[#allocation2 + $0x70] sm:$0xff]
    %v89 = vld [vmem:[#allocation2 + $0x78] sm:$0xff]
    %v90 = vld [vmem:[#allocation2 + $0x80] sm:$0xff]
    %v91 = vld [vmem:[#allocation2 + $0x88] sm:$0xff]
    %v92 = vld [vmem:[#allocation2 + $0x90] sm:$0xff]
    %v93 = vld [vmem:[#allocation2 + $0x98] sm:$0xff]
    %v94 = vld [vmem:[#allocation2 + $0xa0] sm:$0xff]
    %v95 = vld [vmem:[#allocation2 + $0xa8] sm:$0xff]
    %v96 = vld [vmem:[#allocation2 + $0xb0] sm:$0xff]
    %v97 = vld [vmem:[#allocation2 + $0xb8] sm:$0xff]
    %v98 = vld [vmem:[#allocation2 + $0xc0] sm:$0xff]
    %v99 = vld [vmem:[#allocation2 + $0xc8] sm:$0xff]
    %v100 = vld [vmem:[#allocation2 + $0xd0] sm:$0xff]
    %v101 = vld [vmem:[#allocation2 + $0xd8] sm:$0xff]
    %v102 = vld [vmem:[#allocation2 + $0xe0] sm:$0xff]
    %v103 = vld [vmem:[#allocation2 + $0xe8] sm:$0xff]
    %v104 = vld [vmem:[#allocation2 + $0xf0] sm:$0xff]
    %v105 = vld [vmem:[#allocation2 + $0xf8] sm:$0xff]
    %v106 = vld [vmem:[#allocation2 + $0x100] sm:$0xff]
    %v107 = vld [vmem:[#allocation2 + $0x108] sm:$0xff]
    %v108 = vld [vmem:[#allocation2 + $0x110] sm:$0xff]
    %v109 = vld [vmem:[#allocation2 + $0x118] sm:$0xff]
    %v110 = vld [vmem:[#allocation2 + $0x120] sm:$0xff]
    %v111 = vld [vmem:[#allocation2 + $0x128] sm:$0xff]
    %v112 = vld [vmem:[#allocation2 + $0x130] sm:$0xff]
    %v113 = vld [vmem:[#allocation2 + $0x138] sm:$0xff]
    %v114 = vld [vmem:[#allocation2 + $0x140] sm:$0xff]
    %v115 = vld [vmem:[#allocation2 + $0x148] sm:$0xff]
    %v116 = vld [vmem:[#allocation2 + $0x150] sm:$0xff]
    %v117 = vld [vmem:[#allocation2 + $0x158] sm:$0xff]
    %v118 = vld [vmem:[#allocation2 + $0x160] sm:$0xff]
    %v119 = vld [vmem:[#allocation2 + $0x168] sm:$0xff]
    %v120 = vld [vmem:[#allocation2 + $0x170] sm:$0xff]
    %v121 = vld [vmem:[#allocation2 + $0x178] sm:$0xff]
    %v122 = vld [vmem:[#allocation2 + $0x180] sm:$0xff]
    %v123 = vld [vmem:[#allocation2 + $0x188] sm:$0xff]
    %v124 = vld [vmem:[#allocation2 + $0x190] sm:$0xff]
    %v125 = vld [vmem:[#allocation2 + $0x198] sm:$0xff]
    %v126 = vld [vmem:[#allocation2 + $0x1a0] sm:$0xff]
    %v127 = vld [vmem:[#allocation2 + $0x1a8] sm:$0xff]
    %v128 = vld [vmem:[#allocation2 + $0x1b0] sm:$0xff]
    %v129 = vld [vmem:[#allocation2 + $0x1b8] sm:$0xff]
    %v130 = vld [vmem:[#allocation2 + $0x1c0] sm:$0xff]
    %v131 = vld [vmem:[#allocation2 + $0x1c8] sm:$0xff]
    %v132 = vld [vmem:[#allocation2 + $0x1d0] sm:$0xff]
    %v133 = vld [vmem:[#allocation2 + $0x1d8] sm:$0xff]
    %v134 = vld [vmem:[#allocation2 + $0x1e0] sm:$0xff]
    %v135 = vld [vmem:[#allocation2 + $0x1e8] sm:$0xff]
    %v136 = vld [vmem:[#allocation2 + $0x1f0] sm:$0xff]
    %v137 = vld [vmem:[#allocation2 + $0x1f8] sm:$0xff]
    %138 = vmatprep.subr.mxu0 %v75
    %139 = vmatpush1.msra.mxu0 %v74
    %140 = vmatprep.subr.mxu0 %v77
    %141 = vmatpush1.msra.mxu0 %v76
    %142 = vmatprep.subr.mxu0 %v79
    %143 = vmatpush1.msra.mxu0 %v78
    %144 = vmatprep.subr.mxu0 %v81
    %145 = vmatpush1.msra.mxu0 %v80
    %146 = vmatprep.subr.mxu0 %v83
    %147 = vmatpush1.msra.mxu0 %v82
    %148 = vmatprep.subr.mxu0 %v85
    %149 = vmatpush1.msra.mxu0 %v84
    %150 = vmatprep.subr.mxu0 %v87
    %151 = vmatpush1.msra.mxu0 %v86
    %152 = vmatprep.subr.mxu0 %v89
    %153 = vmatpush1.msra.mxu0 %v88
    %154 = vmatprep.subr.mxu0 %v91
    %155 = vmatpush1.msra.mxu0 %v90
    %156 = vmatprep.subr.mxu0 %v93
    %157 = vmatpush1.msra.mxu0 %v92
    %158 = vmatprep.subr.mxu0 %v95
    %159 = vmatpush1.msra.mxu0 %v94
    %160 = vmatprep.subr.mxu0 %v97
    %161 = vmatpush1.msra.mxu0 %v96
    %162 = vmatprep.subr.mxu0 %v99
    %163 = vmatpush1.msra.mxu0 %v98
    %164 = vmatprep.subr.mxu0 %v101
    %165 = vmatpush1.msra.mxu0 %v100
    %166 = vmatprep.subr.mxu0 %v103
    %167 = vmatpush1.msra.mxu0 %v102
    %168 = vmatprep.subr.mxu0 %v105
    %169 = vmatpush1.msra.mxu0 %v104
    %170 = vmatprep.subr.mxu0 %v107
    %171 = vmatpush1.msra.mxu0 %v106
    %172 = vmatprep.subr.mxu0 %v109
    %173 = vmatpush1.msra.mxu0 %v108
    %174 = vmatprep.subr.mxu0 %v111
    %175 = vmatpush1.msra.mxu0 %v110
    %176 = vmatprep.subr.mxu0 %v113
    %177 = vmatpush1.msra.mxu0 %v112
    %178 = vmatprep.subr.mxu0 %v115
    %179 = vmatpush1.msra.mxu0 %v114
    %180 = vmatprep.subr.mxu0 %v117
    %181 = vmatpush1.msra.mxu0 %v116
    %182 = vmatprep.subr.mxu0 %v119
    %183 = vmatpush1.msra.mxu0 %v118
    %184 = vmatprep.subr.mxu0 %v121
    %185 = vmatpush1.msra.mxu0 %v120
    %186 = vmatprep.subr.mxu0 %v123
    %187 = vmatpush1.msra.mxu0 %v122
    %188 = vmatprep.subr.mxu0 %v125
    %189 = vmatpush1.msra.mxu0 %v124
    %190 = vmatprep.subr.mxu0 %v127
    %191 = vmatpush1.msra.mxu0 %v126
    %192 = vmatprep.subr.mxu0 %v129
    %193 = vmatpush1.msra.mxu0 %v128
    %194 = vmatprep.subr.mxu0 %v131
    %195 = vmatpush1.msra.mxu0 %v130
    %196 = vmatprep.subr.mxu0 %v133
    %197 = vmatpush1.msra.mxu0 %v132
    %198 = vmatprep.subr.mxu0 %v135
    %199 = vmatpush1.msra.mxu0 %v134
    %200 = vmatprep.subr.mxu0 %v137
    %201 = vmatpush1.msra.mxu0 %v136
    %202 = vmatprep.mubr.f32.mxu0 %v73
    %203 = vmatmul.mubr.f32.gmra.mrb[0].mxu0 %v72
    %v204 = vpop.f32.mrb[0].mxu0
    %v205 = vadd.f32 0.0, %v204
    %v206 = vpop.f32.mrb[0].mxu0
    %v207 = vadd.f32 0.0, %v206
    %208 = vdwg.mxu0
    %v209 = vsub.f32 %v72, %v205
    %v210 = vsub.f32 %v73, %v207
    %v211 = vmul.f32 %v209, %v209
    %v212 = vmul.f32 %v210, %v210
    %v213 = vld [vmem:[%s2] sm:$0xff]
    %v214 = vld [vmem:[%s2 + $0x8] sm:$0xff]
    %v215 = vld [vmem:[%s2 + $0x10] sm:$0xff]
    %v216 = vld [vmem:[%s2 + $0x18] sm:$0xff]
    %v217 = vld [vmem:[%s2 + $0x20] sm:$0xff]
    %v218 = vld [vmem:[%s2 + $0x28] sm:$0xff]
    %v219 = vld [vmem:[%s2 + $0x30] sm:$0xff]
    %v220 = vld [vmem:[%s2 + $0x38] sm:$0xff]
    %v221 = vld [vmem:[%s2 + $0x40] sm:$0xff]
    %v222 = vld [vmem:[%s2 + $0x48] sm:$0xff]
    %v223 = vld [vmem:[%s2 + $0x50] sm:$0xff]
    %v224 = vld [vmem:[%s2 + $0x58] sm:$0xff]
    %v225 = vld [vmem:[%s2 + $0x60] sm:$0xff]
    %v226 = vld [vmem:[%s2 + $0x68] sm:$0xff]
    %v227 = vld [vmem:[%s2 + $0x70] sm:$0xff]
    %v228 = vld [vmem:[%s2 + $0x78] sm:$0xff]
    %v229 = vld [vmem:[%s2 + $0x80] sm:$0xff]
    %v230 = vld [vmem:[%s2 + $0x88] sm:$0xff]
    %v231 = vld [vmem:[%s2 + $0x90] sm:$0xff]
    %v232 = vld [vmem:[%s2 + $0x98] sm:$0xff]
    %v233 = vld [vmem:[%s2 + $0xa0] sm:$0xff]
    %v234 = vld [vmem:[%s2 + $0xa8] sm:$0xff]
    %v235 = vld [vmem:[%s2 + $0xb0] sm:$0xff]
    %v236 = vld [vmem:[%s2 + $0xb8] sm:$0xff]
    %v237 = vld [vmem:[%s2 + $0xc0] sm:$0xff]
    %v238 = vld [vmem:[%s2 + $0xc8] sm:$0xff]
    %v239 = vld [vmem:[%s2 + $0xd0] sm:$0xff]
    %v240 = vld [vmem:[%s2 + $0xd8] sm:$0xff]
    %v241 = vld [vmem:[%s2 + $0xe0] sm:$0xff]
    %v242 = vld [vmem:[%s2 + $0xe8] sm:$0xff]
    %v243 = vld [vmem:[%s2 + $0xf0] sm:$0xff]
    %v244 = vld [vmem:[%s2 + $0xf8] sm:$0xff]
    %245 = vmatprep.subr.mxu0 0.0
    %246 = vmatpush1.msra.mxu0 %v213
    %247 = vmatprep.subr.mxu0 0.0
    %248 = vmatpush1.msra.mxu0 %v214
    %249 = vmatprep.subr.mxu0 0.0
    %250 = vmatpush1.msra.mxu0 %v215
    %251 = vmatprep.subr.mxu0 0.0
    %252 = vmatpush1.msra.mxu0 %v216
    %253 = vmatprep.subr.mxu0 0.0
    %254 = vmatpush1.msra.mxu0 %v217
    %255 = vmatprep.subr.mxu0 0.0
    %256 = vmatpush1.msra.mxu0 %v218
    %257 = vmatprep.subr.mxu0 0.0
    %258 = vmatpush1.msra.mxu0 %v219
    %259 = vmatprep.subr.mxu0 0.0
    %260 = vmatpush1.msra.mxu0 %v220
    %261 = vmatprep.subr.mxu0 0.0
    %262 = vmatpush1.msra.mxu0 %v221
    %263 = vmatprep.subr.mxu0 0.0
    %264 = vmatpush1.msra.mxu0 %v222
    %265 = vmatprep.subr.mxu0 0.0
    %266 = vmatpush1.msra.mxu0 %v223
    %267 = vmatprep.subr.mxu0 0.0
    %268 = vmatpush1.msra.mxu0 %v224
    %269 = vmatprep.subr.mxu0 0.0
    %270 = vmatpush1.msra.mxu0 %v225
    %271 = vmatprep.subr.mxu0 0.0
    %272 = vmatpush1.msra.mxu0 %v226
    %273 = vmatprep.subr.mxu0 0.0
    %274 = vmatpush1.msra.mxu0 %v227
    %275 = vmatprep.subr.mxu0 0.0
    %276 = vmatpush1.msra.mxu0 %v228
    %277 = vmatprep.subr.mxu0 0.0
    %278 = vmatpush1.msra.mxu0 %v229
    %279 = vmatprep.subr.mxu0 0.0
    %280 = vmatpush1.msra.mxu0 %v230
    %281 = vmatprep.subr.mxu0 0.0
    %282 = vmatpush1.msra.mxu0 %v231
    %283 = vmatprep.subr.mxu0 0.0
    %284 = vmatpush1.msra.mxu0 %v232
    %285 = vmatprep.subr.mxu0 0.0
    %286 = vmatpush1.msra.mxu0 %v233
    %287 = vmatprep.subr.mxu0 0.0
    %288 = vmatpush1.msra.mxu0 %v234
    %289 = vmatprep.subr.mxu0 0.0
    %290 = vmatpush1.msra.mxu0 %v235
    %291 = vmatprep.subr.mxu0 0.0
    %292 = vmatpush1.msra.mxu0 %v236
    %293 = vmatprep.subr.mxu0 0.0
    %294 = vmatpush1.msra.mxu0 %v237
    %295 = vmatprep.subr.mxu0 0.0
    %296 = vmatpush1.msra.mxu0 %v238
    %297 = vmatprep.subr.mxu0 0.0
    %298 = vmatpush1.msra.mxu0 %v239
    %299 = vmatprep.subr.mxu0 0.0
    %300 = vmatpush1.msra.mxu0 %v240
    %301 = vmatprep.subr.mxu0 0.0
    %302 = vmatpush1.msra.mxu0 %v241
    %303 = vmatprep.subr.mxu0 0.0
    %304 = vmatpush1.msra.mxu0 %v242
    %305 = vmatprep.subr.mxu0 0.0
    %306 = vmatpush1.msra.mxu0 %v243
    %307 = vmatprep.subr.mxu0 0.0
    %308 = vmatpush1.msra.mxu0 %v244
    %309 = vmatprep.mubr.f32.mxu0 %v212
    %310 = vmatmul.mubr.f32.gmra.mrb[0].mxu0 %v211
    %v311 = vpop.f32.mrb[0].mxu0
    %v312 = vadd.f32 1e-05, %v311
    %v313 = vpop.f32.mrb[0].mxu0
    %314 = vdwg.mxu0
    %v315 = vrsqrt.pop %v312
    %v316 = vld [vmem:[#allocation5] sm:$0xff]
    %v318 = vcombine.high %v316, %v316
    %vm319 = vcmask 31744
    %v321 = vsel %vm319, %v315, 0
    %vm323 = vcmask 1043456
    %v324 = vsel %vm323, %v316, 0
    %v326 = vsel %vm323, %v318, 0
    %328 = vmatprep.subr.mxu0 %v326
    %329 = vmatpush1.msra.mxu0 %v324
    %330 = vmatprep.subr.mxu0 0.0
    %331 = vmatpush1.msra.mxu0 0.0
    %332 = vmatprep.subr.mxu0 0.0
    %333 = vmatpush1.msra.mxu0 0.0
    %334 = vmatprep.subr.mxu0 0.0
    %335 = vmatpush1.msra.mxu0 0.0
    %336 = vmatprep.subr.mxu0 0.0
    %337 = vmatpush1.msra.mxu0 0.0
    %338 = vmatprep.subr.mxu0 0.0
    %339 = vmatpush1.msra.mxu0 0.0
    %340 = vmatprep.subr.mxu0 0.0
    %341 = vmatpush1.msra.mxu0 0.0
    %342 = vmatprep.subr.mxu0 0.0
    %343 = vmatpush1.msra.mxu0 0.0
    %344 = vmatprep.subr.mxu0 0.0
    %345 = vmatpush1.msra.mxu0 0.0
    %346 = vmatprep.subr.mxu0 0.0
    %347 = vmatpush1.msra.mxu0 0.0
    %348 = vmatprep.subr.mxu0 0.0
    %349 = vmatpush1.msra.mxu0 0.0
    %350 = vmatprep.subr.mxu0 0.0
    %351 = vmatpush1.msra.mxu0 0.0
    %352 = vmatprep.subr.mxu0 0.0
    %353 = vmatpush1.msra.mxu0 0.0
    %354 = vmatprep.subr.mxu0 0.0
    %355 = vmatpush1.msra.mxu0 0.0
    %356 = vmatprep.subr.mxu0 0.0
    %357 = vmatpush1.msra.mxu0 0.0
    %358 = vmatprep.subr.mxu0 0.0
    %359 = vmatpush1.msra.mxu0 0.0
    %360 = vmatprep.subr.mxu0 0.0
    %361 = vmatpush1.msra.mxu0 0.0
    %362 = vmatprep.subr.mxu0 0.0
    %363 = vmatpush1.msra.mxu0 0.0
    %364 = vmatprep.subr.mxu0 0.0
    %365 = vmatpush1.msra.mxu0 0.0
    %366 = vmatprep.subr.mxu0 0.0
    %367 = vmatpush1.msra.mxu0 0.0
    %368 = vmatprep.subr.mxu0 0.0
    %369 = vmatpush1.msra.mxu0 0.0
    %370 = vmatprep.subr.mxu0 0.0
    %371 = vmatpush1.msra.mxu0 0.0
    %372 = vmatprep.subr.mxu0 0.0
    %373 = vmatpush1.msra.mxu0 0.0
    %374 = vmatprep.subr.mxu0 0.0
    %375 = vmatpush1.msra.mxu0 0.0
    %376 = vmatprep.subr.mxu0 0.0
    %377 = vmatpush1.msra.mxu0 0.0
    %378 = vmatprep.subr.mxu0 0.0
    %379 = vmatpush1.msra.mxu0 0.0
    %380 = vmatprep.subr.mxu0 0.0
    %381 = vmatpush1.msra.mxu0 0.0
    %382 = vmatprep.subr.mxu0 0.0
    %383 = vmatpush1.msra.mxu0 0.0
    %384 = vmatprep.subr.mxu0 0.0
    %385 = vmatpush1.msra.mxu0 0.0
    %386 = vmatprep.subr.mxu0 0.0
    %387 = vmatpush1.msra.mxu0 0.0
    %388 = vmatprep.subr.mxu0 0.0
    %389 = vmatpush1.msra.mxu0 0.0
    %390 = vmatprep.subr.mxu0 0.0
    %391 = vmatpush1.msra.mxu0 0.0
    %392 = vmatprep.mubr.f32.mxu0 0.0
    %393 = vmatmul.mubr.f32.gmra.mrb[0].mxu0 %v321
    %v394 = vpop.f32.mrb[0].mxu0
    %v395 = vadd.f32 0.0, %v394
    %v396 = vpop.f32.mrb[0].mxu0
    %v397 = vadd.f32 0.0, %v396
    %398 = vdwg.mxu0
    %v399 = vmul.f32 %v209, %v395
    %v400 = vmul.f32 %v210, %v397
    %v401 = vld [vmem:[%s4] sm:$0xff]
    %v402 = vld [vmem:[%s4 + $0x8] sm:$0xff]
    %v403 = vld [vmem:[%s4 + $0x10] sm:$0xff]
    %v404 = vld [vmem:[%s4 + $0x18] sm:$0xff]
    %v405 = vld [vmem:[%s4 + $0x20] sm:$0xff]
    %v406 = vld [vmem:[%s4 + $0x28] sm:$0xff]
    %v407 = vld [vmem:[%s4 + $0x30] sm:$0xff]
    %v408 = vld [vmem:[%s4 + $0x38] sm:$0xff]
    %v409 = vld [vmem:[%s4 + $0x40] sm:$0xff]
    %v410 = vld [vmem:[%s4 + $0x48] sm:$0xff]
    %v411 = vld [vmem:[%s4 + $0x50] sm:$0xff]
    %v412 = vld [vmem:[%s4 + $0x58] sm:$0xff]
    %v413 = vld [vmem:[%s4 + $0x60] sm:$0xff]
    %v414 = vld [vmem:[%s4 + $0x68] sm:$0xff]
    %v415 = vld [vmem:[%s4 + $0x70] sm:$0xff]
    %v416 = vld [vmem:[%s4 + $0x78] sm:$0xff]
    %v417 = vld [vmem:[%s4 + $0x80] sm:$0xff]
    %v418 = vld [vmem:[%s4 + $0x88] sm:$0xff]
    %v419 = vld [vmem:[%s4 + $0x90] sm:$0xff]
    %v420 = vld [vmem:[%s4 + $0x98] sm:$0xff]
    %v421 = vld [vmem:[%s4 + $0xa0] sm:$0xff]
    %v422 = vld [vmem:[%s4 + $0xa8] sm:$0xff]
    %v423 = vld [vmem:[%s4 + $0xb0] sm:$0xff]
    %v424 = vld [vmem:[%s4 + $0xb8] sm:$0xff]
    %v425 = vld [vmem:[%s4 + $0xc0] sm:$0xff]
    %v426 = vld [vmem:[%s4 + $0xc8] sm:$0xff]
    %v427 = vld [vmem:[%s4 + $0xd0] sm:$0xff]
    %v428 = vld [vmem:[%s4 + $0xd8] sm:$0xff]
    %v429 = vld [vmem:[%s4 + $0xe0] sm:$0xff]
    %v430 = vld [vmem:[%s4 + $0xe8] sm:$0xff]
    %v431 = vld [vmem:[%s4 + $0xf0] sm:$0xff]
    %v432 = vld [vmem:[%s4 + $0xf8] sm:$0xff]
    %v433 = vld [vmem:[%s5] sm:$0x1]
    %v435 = vlaneseq
    %v436 = vshrl.u32 %v435, 7
    %v437 = vsub.s32 0, %v436
    %v438 = vrot.slane %v433, %v437
    %440 = vmatprep.subr.mxu0 0.0
    %441 = vmatpush1.msra.mxu0 %v401
    %442 = vmatprep.subr.mxu0 0.0
    %443 = vmatpush1.msra.mxu0 %v402
    %444 = vmatprep.subr.mxu0 0.0
    %445 = vmatpush1.msra.mxu0 %v403
    %446 = vmatprep.subr.mxu0 0.0
    %447 = vmatpush1.msra.mxu0 %v404
    %448 = vmatprep.subr.mxu0 0.0
    %449 = vmatpush1.msra.mxu0 %v405
    %450 = vmatprep.subr.mxu0 0.0
    %451 = vmatpush1.msra.mxu0 %v406
    %452 = vmatprep.subr.mxu0 0.0
    %453 = vmatpush1.msra.mxu0 %v407
    %454 = vmatprep.subr.mxu0 0.0
    %455 = vmatpush1.msra.mxu0 %v408
    %456 = vmatprep.subr.mxu0 0.0
    %457 = vmatpush1.msra.mxu0 %v409
    %458 = vmatprep.subr.mxu0 0.0
    %459 = vmatpush1.msra.mxu0 %v410
    %460 = vmatprep.subr.mxu0 0.0
    %461 = vmatpush1.msra.mxu0 %v411
    %462 = vmatprep.subr.mxu0 0.0
    %463 = vmatpush1.msra.mxu0 %v412
    %464 = vmatprep.subr.mxu0 0.0
    %465 = vmatpush1.msra.mxu0 %v413
    %466 = vmatprep.subr.mxu0 0.0
    %467 = vmatpush1.msra.mxu0 %v414
    %468 = vmatprep.subr.mxu0 0.0
    %469 = vmatpush1.msra.mxu0 %v415
    %470 = vmatprep.subr.mxu0 0.0
    %471 = vmatpush1.msra.mxu0 %v416
    %472 = vmatprep.subr.mxu0 0.0
    %473 = vmatpush1.msra.mxu0 %v417
    %474 = vmatprep.subr.mxu0 0.0
    %475 = vmatpush1.msra.mxu0 %v418
    %476 = vmatprep.subr.mxu0 0.0
    %477 = vmatpush1.msra.mxu0 %v419
    %478 = vmatprep.subr.mxu0 0.0
    %479 = vmatpush1.msra.mxu0 %v420
    %480 = vmatprep.subr.mxu0 0.0
    %481 = vmatpush1.msra.mxu0 %v421
    %482 = vmatprep.subr.mxu0 0.0
    %483 = vmatpush1.msra.mxu0 %v422
    %484 = vmatprep.subr.mxu0 0.0
    %485 = vmatpush1.msra.mxu0 %v423
    %486 = vmatprep.subr.mxu0 0.0
    %487 = vmatpush1.msra.mxu0 %v424
    %488 = vmatprep.subr.mxu0 0.0
    %489 = vmatpush1.msra.mxu0 %v425
    %490 = vmatprep.subr.mxu0 0.0
    %491 = vmatpush1.msra.mxu0 %v426
    %492 = vmatprep.subr.mxu0 0.0
    %493 = vmatpush1.msra.mxu0 %v427
    %494 = vmatprep.subr.mxu0 0.0
    %495 = vmatpush1.msra.mxu0 %v428
    %496 = vmatprep.subr.mxu0 0.0
    %497 = vmatpush1.msra.mxu0 %v429
    %498 = vmatprep.subr.mxu0 0.0
    %499 = vmatpush1.msra.mxu0 %v430
    %500 = vmatprep.subr.mxu0 0.0
    %501 = vmatpush1.msra.mxu0 %v431
    %502 = vmatprep.subr.mxu0 0.0
    %503 = vmatpush1.msra.mxu0 %v432
    %504 = vmatprep.mubr.f32.mxu0 %v400
    %505 = vmatmul.mubr.f32.gmra.mrb[0].mxu0 %v399
    %v506 = vpop.f32.mrb[0].mxu0
    %v507 = vadd.f32 %v438, %v506
    %v508 = vpop.f32.mrb[0].mxu0
    %509 = vdwg.mxu0
    %510 = vst [vmem:[#allocation8] sm:$0xff] %v507
    %v511 = vld [vmem:[#allocation7] sm:$0xff]
    %v512 = vld [vmem:[#allocation7 + $0x8] sm:$0xff]
    %v513 = vld [vmem:[#allocation7 + $0x10] sm:$0xff]
    %v514 = vld [vmem:[#allocation7 + $0x18] sm:$0xff]
    %v515 = vld [vmem:[#allocation7 + $0x20] sm:$0xff]
    %v516 = vld [vmem:[#allocation7 + $0x28] sm:$0xff]
    %v517 = vld [vmem:[#allocation7 + $0x30] sm:$0xff]
    %v518 = vld [vmem:[#allocation7 + $0x38] sm:$0xff]
    %v519 = vld [vmem:[#allocation7 + $0x40] sm:$0xff]
    %v520 = vld [vmem:[#allocation7 + $0x48] sm:$0xff]
    %v521 = vld [vmem:[#allocation7 + $0x50] sm:$0xff]
    %v522 = vld [vmem:[#allocation7 + $0x58] sm:$0xff]
    %v523 = vld [vmem:[#allocation7 + $0x60] sm:$0xff]
    %v524 = vld [vmem:[#allocation7 + $0x68] sm:$0xff]
    %v525 = vld [vmem:[#allocation7 + $0x70] sm:$0xff]
    %v526 = vld [vmem:[#allocation7 + $0x78] sm:$0xff]
    %v527 = vld [vmem:[%s7] sm:$0x1]
    %v529 = vlaneseq
    %v530 = vshrl.u32 %v529, 7
    %v531 = vsub.s32 0, %v530
    %v532 = vrot.slane %v527, %v531
    %534 = vmatprep.subr.mxu0 0.0
    %535 = vmatpush1.msra.mxu0 %v511
    %536 = vmatprep.subr.mxu0 0.0
    %537 = vmatpush1.msra.mxu0 %v512
    %538 = vmatprep.subr.mxu0 0.0
    %539 = vmatpush1.msra.mxu0 %v513
    %540 = vmatprep.subr.mxu0 0.0
    %541 = vmatpush1.msra.mxu0 %v514
    %542 = vmatprep.subr.mxu0 0.0
    %543 = vmatpush1.msra.mxu0 %v515
    %544 = vmatprep.subr.mxu0 0.0
    %545 = vmatpush1.msra.mxu0 %v516
    %546 = vmatprep.subr.mxu0 0.0
    %547 = vmatpush1.msra.mxu0 %v517
    %548 = vmatprep.subr.mxu0 0.0
    %549 = vmatpush1.msra.mxu0 %v518
    %550 = vmatprep.subr.mxu0 0.0
    %551 = vmatpush1.msra.mxu0 %v519
    %552 = vmatprep.subr.mxu0 0.0
    %553 = vmatpush1.msra.mxu0 %v520
    %554 = vmatprep.subr.mxu0 0.0
    %555 = vmatpush1.msra.mxu0 %v521
    %556 = vmatprep.subr.mxu0 0.0
    %557 = vmatpush1.msra.mxu0 %v522
    %558 = vmatprep.subr.mxu0 0.0
    %559 = vmatpush1.msra.mxu0 %v523
    %560 = vmatprep.subr.mxu0 0.0
    %561 = vmatpush1.msra.mxu0 %v524
    %562 = vmatprep.subr.mxu0 0.0
    %563 = vmatpush1.msra.mxu0 %v525
    %564 = vmatprep.subr.mxu0 0.0
    %565 = vmatpush1.msra.mxu0 %v526
    %566 = vmatprep.subr.mxu0 0.0
    %567 = vmatpush1.msra.mxu0 0.0
    %568 = vmatprep.subr.mxu0 0.0
    %569 = vmatpush1.msra.mxu0 0.0
    %570 = vmatprep.subr.mxu0 0.0
    %571 = vmatpush1.msra.mxu0 0.0
    %572 = vmatprep.subr.mxu0 0.0
    %573 = vmatpush1.msra.mxu0 0.0
    %574 = vmatprep.subr.mxu0 0.0
    %575 = vmatpush1.msra.mxu0 0.0
    %576 = vmatprep.subr.mxu0 0.0
    %577 = vmatpush1.msra.mxu0 0.0
    %578 = vmatprep.subr.mxu0 0.0
    %579 = vmatpush1.msra.mxu0 0.0
    %580 = vmatprep.subr.mxu0 0.0
    %581 = vmatpush1.msra.mxu0 0.0
    %582 = vmatprep.subr.mxu0 0.0
    %583 = vmatpush1.msra.mxu0 0.0
    %584 = vmatprep.subr.mxu0 0.0
    %585 = vmatpush1.msra.mxu0 0.0
    %586 = vmatprep.subr.mxu0 0.0
    %587 = vmatpush1.msra.mxu0 0.0
    %588 = vmatprep.subr.mxu0 0.0
    %589 = vmatpush1.msra.mxu0 0.0
    %590 = vmatprep.subr.mxu0 0.0
    %591 = vmatpush1.msra.mxu0 0.0
    %592 = vmatprep.subr.mxu0 0.0
    %593 = vmatpush1.msra.mxu0 0.0
    %594 = vmatprep.subr.mxu0 0.0
    %595 = vmatpush1.msra.mxu0 0.0
    %596 = vmatprep.subr.mxu0 0.0
    %597 = vmatpush1.msra.mxu0 0.0
    %598 = vmatprep.mubr.f32.mxu0 0.0
    %599 = vmatmul.mubr.f32.gmra.mrb[0].mxu0 %v507
    %v600 = vpop.f32.mrb[0].mxu0
    %v601 = vadd.f32 %v532, %v600
    %v602 = vpop.f32.mrb[0].mxu0
    %603 = vdwg.mxu0
    %604 = vst [vmem:[#allocation9] sm:$0xff] %v601
    // Predicated region
    $region46: #{tpu_custom_call.1} parent=1 // pred_check
      _
    $region47: #{tpu_custom_call.1} parent=1 // pred_check_branch
      %606 = sbr.rel (0) target = $region49
    $region48: #{tpu_custom_call.1} parent=1 // pred_region
      %s608 = ssub.s32 128, 128
      %609 = vsyncadd [#allocation4], %s608
      %s611 = sshll.u32 [#allocation8], 4
      %s612 = int_to_ptr.vmem [resolvable:$true] %s611
      %614 = dma.vmem_to_hbm [thread:$0]  %s612, 128, %s8, [#allocation4]
    $region49: #{tpu_custom_call.1} parent=1 // pred_fallthru
      _
    // Predicated region
    $region50: #{tpu_custom_call.1} parent=1 // pred_check
      _
    $region51: #{tpu_custom_call.1} parent=1 // pred_check_branch
      %616 = sbr.rel (0) target = $region53
    $region52: #{tpu_custom_call.1} parent=1 // pred_region
      %s618 = ssub.s32 128, 128
      %619 = vsyncadd [#allocation10], %s618
      %s621 = sshll.u32 [#allocation9], 4
      %s622 = int_to_ptr.vmem [resolvable:$true] %s621
      %624 = dma.vmem_to_hbm [thread:$0]  %s622, 128, %s9, [#allocation10]
    $region53: #{tpu_custom_call.1} parent=1 // pred_fallthru
      _
    // Predicated region
    $region54: #{tpu_custom_call.1} parent=1 // pred_check
      _
    $region55: #{tpu_custom_call.1} parent=1 // pred_check_branch
      %626 = sbr.rel (0) target = $region57
    $region56: #{tpu_custom_call.1} parent=1 // pred_region
      %627 = dma.done [#allocation4], 128
    $region57: #{tpu_custom_call.1} parent=1 // pred_fallthru
      _
    // Predicated region
    $region58: #{tpu_custom_call.1} parent=1 // pred_check
      _
    $region59: #{tpu_custom_call.1} parent=1 // pred_check_branch
      %629 = sbr.rel (0) target = $region61
    $region60: #{tpu_custom_call.1} parent=1 // pred_region
      %630 = dma.done [#allocation10], 128
    $region61: #{tpu_custom_call.1} parent=1 // pred_fallthru
      _
    %631 = vsyncpa [#allocation3], 1
    %632 = vsyncpa [#allocation6], 1
    %633 = vsyncpa [#allocation4], 1
    %634 = vsyncpa [#allocation10], 1

</llo_original>
